<compile_context>
chip_gen: v5e
topology: v5e:2x2
jax: 0.10.0
libtpu: 0.0.40
codegen_flags: <defaults>
</compile_context>

<pallas_src>
import functools
import math

import jax
import jax.numpy as jnp
from jax.experimental import pallas as pl
from jax.experimental.pallas import tpu as pltpu


_VMEM_LIMIT_BYTES = 32 * 1024 * 1024   # explicit scoped-VMEM limit (safe on v5e/v6e/v7x)
_VMEM_BUDGET_BYTES = 20 * 1024 * 1024  # tile-footprint budget (incl. double buffering)


def _round_up(x, m):
    return ((x + m - 1) // m) * m


# --------------------------------------------------------------------------
# Kernels
# --------------------------------------------------------------------------
def _egcl_fused_kernel(a_ref, e_ref, w_ref, o_ref):
    # Whole problem resident in VMEM: out = relu(A @ (E @ W)).
    # f32 -> bf16 casts happen on the VPU in-kernel (no extra HBM pass over A);
    # both matmuls accumulate in f32 on the MXU.
    t = jnp.dot(e_ref[...].astype(jnp.bfloat16),
                w_ref[...].astype(jnp.bfloat16),
                preferred_element_type=jnp.float32).astype(jnp.bfloat16)
    out = jnp.dot(a_ref[...].astype(jnp.bfloat16), t,
                  preferred_element_type=jnp.float32)
    o_ref[...] = jnp.maximum(out, 0.0).astype(o_ref.dtype)


def _ew_kernel(e_ref, w_ref, t_ref):
    # T = E @ W, row-tiled.  bf16 output feeds the A@T kernel's MXU directly.
    t_ref[...] = jnp.dot(e_ref[...].astype(jnp.bfloat16),
                         w_ref[...].astype(jnp.bfloat16),
                         preferred_element_type=jnp.float32).astype(t_ref.dtype)


def _at_relu_kernel(a_ref, t_ref, o_ref):
    # out = relu(A @ T), accumulating directly into the resident f32 output
    # block (its block index is constant along the contraction axis), with a
    # ReLU epilogue on the last contraction step.  No scratch accumulator.
    k = pl.program_id(1)
    partial = jnp.dot(a_ref[...].astype(jnp.bfloat16), t_ref[...],
                      preferred_element_type=jnp.float32)

    @pl.when(k == 0)
    def _():
        o_ref[...] = partial

    @pl.when(k > 0)
    def _():
        o_ref[...] += partial

    @pl.when(k == pl.num_programs(1) - 1)
    def _():
        o_ref[...] = jnp.maximum(o_ref[...], 0.0)


# --------------------------------------------------------------------------
# Footprint / tile selection
# --------------------------------------------------------------------------
def _fused_footprint(n, d):
    # Double-buffered f32 inputs/output + in-kernel bf16 copies + f32 T.
    io = 2 * (n * n + n * d + d * d + n * d) * 4
    work = n * n * 2 + 2 * n * d * 2 + d * d * 2 + n * d * 4
    return io + work


def _tiled_footprint(tm, tk, d):
    a = 2 * tm * tk * 4        # A tiles (f32), double-buffered
    t = 2 * tk * d * 2         # T tiles (bf16), double-buffered
    o = 2 * tm * d * 4         # resident f32 output tile
    work = tm * tk * 2 + tm * d * 4
    return a + t + o + work


def _choose_tiles(n, d):
    # Prefer large row tiles (cuts T re-streaming: T traffic ~ (D/tm)/2 of A's)
    # and a contraction tile that minimises K padding, then is as large as
    # possible (fewer grid steps / less per-step overhead).
    for tm in (512, 256, 128):
        best_key, best_tk = None, None
        for tk in (4096, 2048, 1024, 512, 256, 128):
            if _tiled_footprint(tm, tk, d) > _VMEM_BUDGET_BYTES:
                continue
            key = ((-n) % tk, -tk)
            if best_key is None or key < best_key:
                best_key, best_tk = key, tk
        if best_tk is not None:
            return tm, best_tk
    return 128, 128


# --------------------------------------------------------------------------
# Wrappers
# --------------------------------------------------------------------------
def _egcl_fused(embeddings, normalized_adj, weight):
    n, d = embeddings.shape
    return pl.pallas_call(
        _egcl_fused_kernel,
        out_shape=jax.ShapeDtypeStruct((n, d), embeddings.dtype),
        grid_spec=pltpu.PrefetchScalarGridSpec(
            num_scalar_prefetch=0,
            grid=(1,),
            in_specs=[
                pl.BlockSpec((n, n), lambda i: (0, 0)),   # A (f32, cast in-kernel)
                pl.BlockSpec((n, d), lambda i: (0, 0)),   # E
                pl.BlockSpec((d, d), lambda i: (0, 0)),   # W
            ],
            out_specs=pl.BlockSpec((n, d), lambda i: (0, 0)),
        ),
        compiler_params=pltpu.CompilerParams(
            dimension_semantics=("arbitrary",),
            vmem_limit_bytes=_VMEM_LIMIT_BYTES),
    )(normalized_adj, embeddings, weight)


def _egcl_tiled(embeddings, normalized_adj, weight, tm, tk):
    n, d = embeddings.shape
    nm = _round_up(n, tm)   # padded output-row extent
    nk = _round_up(n, tk)   # padded contraction extent

    # Padding (zeros) only on this path and only when the tiles demand it;
    # zero padding leaves the valid region of the result unchanged.
    a = normalized_adj
    e = embeddings
    if nm > n or nk > n:
        a = jnp.pad(a, ((0, nm - n), (0, nk - n)))
    if nk > n:
        e = jnp.pad(e, ((0, nk - n), (0, 0)))

    # ---- Step 1: T = E @ W  (bf16 out; feeds the second matmul's MXU). ----
    # Row tile that always divides nk (nk is a multiple of tk).
    tm1 = tk
    for cand in (512, 256, 128):
        if tk % cand == 0:
            tm1 = cand
            break
    # TODO(synk): W is kept whole & double-buffered here; fine for typical
    # embedding_dims (<= ~1024 under the 32 MiB limit), would need K-tiling
    # of W for very large D.
    t_int = pl.pallas_call(
        _ew_kernel,
        out_shape=jax.ShapeDtypeStruct((nk, d), jnp.bfloat16),
        grid_spec=pltpu.PrefetchScalarGridSpec(
            num_scalar_prefetch=0,
            grid=(nk // tm1,),
            in_specs=[
                pl.BlockSpec((tm1, d), lambda i: (i, 0)),
                pl.BlockSpec((d, d), lambda i: (0, 0)),
            ],
            out_specs=pl.BlockSpec((tm1, d), lambda i: (i, 0)),
        ),
        compiler_params=pltpu.CompilerParams(
            dimension_semantics=("parallel",),
            vmem_limit_bytes=_VMEM_LIMIT_BYTES),
    )(e, weight)

    # ---- Step 2: out = relu(A @ T), rows parallel x contraction arbitrary. ----
    out_p = pl.pallas_call(
        _at_relu_kernel,
        out_shape=jax.ShapeDtypeStruct((nm, d), jnp.float32),
        grid_spec=pltpu.PrefetchScalarGridSpec(
            num_scalar_prefetch=0,
            grid=(nm // tm, nk // tk),
            in_specs=[
                pl.BlockSpec((tm, tk), lambda i, k: (i, k)),  # A (f32, cast in-kernel)
                pl.BlockSpec((tk, d), lambda i, k: (k, 0)),   # T (bf16)
            ],
            out_specs=pl.BlockSpec((tm, d), lambda i, k: (i, 0)),
        ),
        compiler_params=pltpu.CompilerParams(
            dimension_semantics=("parallel", "arbitrary"),
            vmem_limit_bytes=_VMEM_LIMIT_BYTES),
    )(a, t_int)

    out = out_p[:n] if nm > n else out_p
    if out.dtype != embeddings.dtype:
        out = out.astype(embeddings.dtype)
    return out


@functools.partial(jax.jit, static_argnames=("block_rows", "block_k"))
def egcl_forward(embeddings, normalized_adj, weight, *, block_rows=None, block_k=None):
    n, d = embeddings.shape
    assert normalized_adj.shape == (n, n)
    assert weight.shape == (d, d)

    if (block_rows is None and block_k is None
            and _fused_footprint(n, d) <= _VMEM_BUDGET_BYTES):
        # Whole problem fits comfortably in VMEM: single fused kernel.
        return _egcl_fused(embeddings, normalized_adj, weight)

    if block_rows is None or block_k is None:
        tm_auto, tk_auto = _choose_tiles(n, d)
        tm = block_rows if block_rows is not None else tm_auto
        tk = block_k if block_k is not None else tk_auto
    else:
        tm, tk = block_rows, block_k
    return _egcl_tiled(embeddings, normalized_adj, weight, tm, tk)


# --------------------------------------------------------------------------
# Demo / self-check
# --------------------------------------------------------------------------
def xavier_uniform(key, shape, dtype=jnp.float32):
    fan_in, fan_out = shape[0], shape[1]
    bound = math.sqrt(6.0 / (fan_in + fan_out))
    return jax.random.uniform(key, shape, dtype=dtype, minval=-bound, maxval=bound)


def _make_inputs(key, n, d):
    k_emb, k_adj, k_w = jax.random.split(key, 3)
    embeddings = jax.random.normal(k_emb, (n, d), dtype=jnp.float32)
    # Symmetric-normalized adjacency D^-1/2 (A+I) D^-1/2, deterministic.
    a = (jax.random.uniform(k_adj, (n, n)) > 0.7).astype(jnp.float32)
    a = jnp.maximum(a, a.T) + jnp.eye(n, dtype=jnp.float32)
    deg_inv_sqrt = 1.0 / jnp.sqrt(a.sum(axis=1))
    normalized_adj = deg_inv_sqrt[:, None] * a * deg_inv_sqrt[None, :]
    weight = xavier_uniform(k_w, (d, d))
    return embeddings, normalized_adj, weight


def _check(out, embeddings, normalized_adj, weight):
    # f32 reference (bf16 MXU operands => loosened tolerance).
    ref = jax.nn.relu((normalized_adj @ embeddings) @ weight)
    assert out.shape == ref.shape
    rel_err = jnp.max(jnp.abs(out - ref)) / (jnp.max(jnp.abs(ref)) + 1e-6)
    assert float(rel_err) < 2e-2, f"mismatch vs reference: rel_err={float(rel_err)}"


if __name__ == "__main__":
    key = jax.random.PRNGKey(0)
    k_small, k_big, k_conv = jax.random.split(key, 3)

    # Conv2d weights exist in the module but are dead code in forward();
    # initialize for parity only.
    in_channels, out_channels = 4, 4
    _conv_w = xavier_uniform(k_conv, (out_channels, in_channels)) \
        .reshape(out_channels, in_channels, 1, 1)
    # TODO(synk): nn.Conv2d is unused in EGCL.forward(); not part of the kernel.

    # Case 1: module-scale demo (N=16 nodes, embedding_dims=32) -> fused
    # single-block kernel (no padding, no wrapper passes over A).
    emb_s, adj_s, w_s = _make_inputs(k_small, 16, 32)
    out_s = jax.block_until_ready(egcl_forward(emb_s, adj_s, w_s))
    _check(out_s, emb_s, adj_s, w_s)

    # Case 2: N=384, D=128 -> still the fused single-block path (whole problem
    # << VMEM budget; single grid step, zero padding/slicing).
    emb_b, adj_b, w_b = _make_inputs(k_big, 384, 128)
    out_b = jax.block_until_ready(egcl_forward(emb_b, adj_b, w_b))
    _check(out_b, emb_b, adj_b, w_b)

    # Case 3: force the large-N tiled path on the same problem (grid (3, 3)) to
    # exercise the E@W pre-pass, the rows-parallel x K-arbitrary grid and the
    # resident-output accumulation + ReLU epilogue.
    out_t = jax.block_until_ready(
        egcl_forward(emb_b, adj_b, w_b, block_rows=128, block_k=128))
    _check(out_t, emb_b, adj_b, w_b)

    print("KERNEL_OK")
</pallas_src>

<mosaic_0001>
module attributes {stable_mosaic.version = 11 : i64} {
  func.func @_egcl_fused_kernel(%arg0: i32, %arg1: memref<16x16xf32, #tpu.memory_space<vmem>>, %arg2: memref<16x32xf32, #tpu.memory_space<vmem>>, %arg3: memref<32x32xf32, #tpu.memory_space<vmem>>, %arg4: memref<16x32xf32, #tpu.memory_space<vmem>>) attributes {dimension_semantics = [#tpu.dimension_semantics<arbitrary>], iteration_bounds = array<i64: 1>, scalar_prefetch = 0 : i64, scratch_operands = 0 : i64, tpu.core_type = #tpu.core_type<tc>, window_params = [{pipeline_mode = #tpu.pipeline_mode<synchronous>, transform_indices = @transform_0, window_bounds = array<i64: 16, 16>}, {pipeline_mode = #tpu.pipeline_mode<synchronous>, transform_indices = @transform_1, window_bounds = array<i64: 16, 32>}, {pipeline_mode = #tpu.pipeline_mode<synchronous>, transform_indices = @transform_2, window_bounds = array<i64: 32, 32>}, {pipeline_mode = #tpu.pipeline_mode<synchronous>, transform_indices = @transform_3, window_bounds = array<i64: 16, 32>}]} {
    %c0 = arith.constant 0 : index
    %c0_0 = arith.constant 0 : index
    %0 = vector.load %arg2[%c0, %c0_0] : memref<16x32xf32, #tpu.memory_space<vmem>>, vector<16x32xf32>
    %1 = arith.truncf %0 : vector<16x32xf32> to vector<16x32xbf16>
    %c0_1 = arith.constant 0 : index
    %c0_2 = arith.constant 0 : index
    %2 = vector.load %arg3[%c0_1, %c0_2] : memref<32x32xf32, #tpu.memory_space<vmem>>, vector<32x32xf32>
    %3 = arith.truncf %2 : vector<32x32xf32> to vector<32x32xbf16>
    %cst = arith.constant dense<0.000000e+00> : vector<16x32xf32>
    %4 = tpu.matmul %1, %3, %cst {dimension_numbers = #tpu.dot_dimension_numbers<[1], [0], [0], [1], [0, 0, 1, 1], [], []>} : vector<16x32xbf16>, vector<32x32xbf16>, vector<16x32xf32> -> vector<16x32xf32>
    %5 = arith.truncf %4 : vector<16x32xf32> to vector<16x32xbf16>
    %c0_3 = arith.constant 0 : index
    %c0_4 = arith.constant 0 : index
    %6 = vector.load %arg1[%c0_3, %c0_4] : memref<16x16xf32, #tpu.memory_space<vmem>>, vector<16x16xf32>
    %7 = arith.truncf %6 : vector<16x16xf32> to vector<16x16xbf16>
    %cst_5 = arith.constant dense<0.000000e+00> : vector<16x32xf32>
    %8 = tpu.matmul %7, %5, %cst_5 {dimension_numbers = #tpu.dot_dimension_numbers<[1], [0], [0], [1], [0, 0, 1, 1], [], []>} : vector<16x16xbf16>, vector<16x32xbf16>, vector<16x32xf32> -> vector<16x32xf32>
    %cst_6 = arith.constant 0.000000e+00 : f32
    %9 = vector.broadcast %cst_6 : f32 to vector<16x32xf32>
    %10 = arith.maximumf %8, %9 : vector<16x32xf32>
    %c0_7 = arith.constant 0 : index
    %c0_8 = arith.constant 0 : index
    %11 = vector.load %arg4[%c0_7, %c0_8] : memref<16x32xf32, #tpu.memory_space<vmem>>, vector<16x32xf32>
    tpu.vector_store %arg4[%c0_7, %c0_8], %10 {strides = array<i32>} : memref<16x32xf32, #tpu.memory_space<vmem>>, vector<16x32xf32>,
    return
  }
  func.func @transform_0(%arg0: i32) -> (i32, i32) {
    %c0_i32 = arith.constant 0 : i32
    %c0_i32_0 = arith.constant 0 : i32
    %c0_i32_1 = arith.constant 0 : i32
    return %c0_i32, %c0_i32_0 : i32, i32
  }
  func.func @transform_1(%arg0: i32) -> (i32, i32) {
    %c0_i32 = arith.constant 0 : i32
    %c0_i32_0 = arith.constant 0 : i32
    %c0_i32_1 = arith.constant 0 : i32
    return %c0_i32, %c0_i32_0 : i32, i32
  }
  func.func @transform_2(%arg0: i32) -> (i32, i32) {
    %c0_i32 = arith.constant 0 : i32
    %c0_i32_0 = arith.constant 0 : i32
    %c0_i32_1 = arith.constant 0 : i32
    return %c0_i32, %c0_i32_0 : i32, i32
  }
  func.func @transform_3(%arg0: i32) -> (i32, i32) {
    %c0_i32 = arith.constant 0 : i32
    %c0_i32_0 = arith.constant 0 : i32
    %c0_i32_1 = arith.constant 0 : i32
    return %c0_i32, %c0_i32_0 : i32, i32
  }
}

</mosaic_0001>

<llo_original>
// kernel: egcl_forward.1
$region0: #{egcl_forward.1}
  #allocation0 [shape = 'u32[]', space=smem, size = 0x4, offset = 0x4, fixed_abs, tag = 'smem constant byte address 0x4 - core index']
  #allocation1 [shape = 'u32[72,128]{1,0:T(1,128)}', space=vmem, size = 0x9000, scoped, tag = 'internal scratch']
  %s0 = inlined_call_operand.hbm [shape: f32[16,16], index: 0, kind: input, shape index: {}]
  %s1 = inlined_call_operand.hbm [shape: f32[16,32], index: 1, kind: input, shape index: {}]
  %s2 = inlined_call_operand.hbm [shape: f32[32,32], index: 2, kind: input, shape index: {}]
  %s3 = inlined_call_operand.hbm [shape: f32[16,32], index: 3, kind: output, shape index: {}]
  %s4 = sld [smem:[#allocation0]]
  $region34: #{egcl_forward.1} parent=0
    _
  %s6 = ssub.s32 1, %s4
  %s7 = scalar_select 0, %s6, %s4
  $region1: #{egcl_forward.1} parent=0
    #allocation2 [shape = 'u8[8192]{0}', space=vmem, size = 0x2000, scoped, tag = 'input window, operand 0, single buffered']
    #allocation3 [shape = 's32[1]{0}', space=sflag, size = 0x4, scoped, tag = 'scoped memory for egcl_forward.1']
    #allocation4 [shape = 's32[1]{0}', space=sflag, size = 0x4, scoped, tag = 'scoped memory for egcl_forward.1']
    #allocation5 [shape = 'u8[8192]{0}', space=vmem, size = 0x2000, scoped, tag = 'input window, operand 1, single buffered']
    #allocation6 [shape = 's32[1]{0}', space=sflag, size = 0x4, scoped, tag = 'scoped memory for egcl_forward.1']
    #allocation7 [shape = 'u8[16384]{0}', space=vmem, size = 0x4000, scoped, tag = 'input window, operand 2, single buffered']
    #allocation8 [shape = 'u8[8192]{0}', space=vmem, size = 0x2000, scoped, tag = 'output window, operand 0, single buffered']
    %8 = vsyncpa [#allocation3], 0
    %9 = vsyncpa [#allocation6], 0
    %10 = vsyncpa [#allocation4], 0
    // Predicated region
    $region2: #{egcl_forward.1} parent=1 // pred_check
      _
    $region3: #{egcl_forward.1} parent=1 // pred_check_branch
      %12 = sbr.rel (0) target = $region5
    $region4: #{egcl_forward.1} parent=1 // pred_region
      %14 = vsyncadd [#allocation3], 0
      %s15 = sshll.u32 %s0, 4
      %s16 = int_to_ptr.hbm [resolvable:$true] %s15
      %s17 = sshll.u32 [#allocation2], 4
      %s18 = int_to_ptr.vmem [resolvable:$true] %s17
      %23 = dma.hbm_to_vmem [thread:$0]  %s16, 256, %s18, [#allocation3], 128, 128, 8
    $region5: #{egcl_forward.1} parent=1 // pred_fallthru
      _
    // Predicated region
    $region6: #{egcl_forward.1} parent=1 // pred_check
      _
    $region7: #{egcl_forward.1} parent=1 // pred_check_branch
      %25 = sbr.rel (0) target = $region9
    $region8: #{egcl_forward.1} parent=1 // pred_region
      %27 = vsyncadd [#allocation6], 0
      %s28 = sshll.u32 %s1, 4
      %s29 = int_to_ptr.hbm [resolvable:$true] %s28
      %s30 = sshll.u32 [#allocation5], 4
      %s31 = int_to_ptr.vmem [resolvable:$true] %s30
      %36 = dma.hbm_to_vmem [thread:$0]  %s29, 256, %s31, [#allocation6], 128, 128, 8
    $region9: #{egcl_forward.1} parent=1 // pred_fallthru
      _
    // Predicated region
    $region10: #{egcl_forward.1} parent=1 // pred_check
      _
    $region11: #{egcl_forward.1} parent=1 // pred_check_branch
      %38 = sbr.rel (0) target = $region13
    $region12: #{egcl_forward.1} parent=1 // pred_region
      %40 = vsyncadd [#allocation6], 0
      %s41 = sshll.u32 %s2, 4
      %s42 = int_to_ptr.hbm [resolvable:$true] %s41
      %s43 = sshll.u32 [#allocation7], 4
      %s44 = int_to_ptr.vmem [resolvable:$true] %s43
      %49 = dma.hbm_to_vmem [thread:$0]  %s42, 512, %s44, [#allocation6], 128, 128, 8
    $region13: #{egcl_forward.1} parent=1 // pred_fallthru
      _
    // Predicated region
    $region14: #{egcl_forward.1} parent=1 // pred_check
      _
    $region15: #{egcl_forward.1} parent=1 // pred_check_branch
      %51 = sbr.rel (0) target = $region17
    $region16: #{egcl_forward.1} parent=1 // pred_region
      %53 = dma.done [#allocation3], 256
    $region17: #{egcl_forward.1} parent=1 // pred_fallthru
      _
    // Predicated region
    $region18: #{egcl_forward.1} parent=1 // pred_check
      _
    $region19: #{egcl_forward.1} parent=1 // pred_check_branch
      %55 = sbr.rel (0) target = $region21
    $region20: #{egcl_forward.1} parent=1 // pred_region
      %57 = dma.done [#allocation6], 256
    $region21: #{egcl_forward.1} parent=1 // pred_fallthru
      _
    // Predicated region
    $region22: #{egcl_forward.1} parent=1 // pred_check
      _
    $region23: #{egcl_forward.1} parent=1 // pred_check_branch
      %59 = sbr.rel (0) target = $region25
    $region24: #{egcl_forward.1} parent=1 // pred_region
      %61 = dma.done [#allocation6], 512
    $region25: #{egcl_forward.1} parent=1 // pred_fallthru
      _
    %v63 = vld [vmem:[#allocation5] sm:$0xff]
    %v64 = vld [vmem:[#allocation5 + $0x8] sm:$0xff]
    %v65 = vpack.c.bf16 %v64, %v63
    %v66 = vld [vmem:[#allocation7] sm:$0xff]
    %v67 = vld [vmem:[#allocation7 + $0x8] sm:$0xff]
    %v68 = vld [vmem:[#allocation7 + $0x10] sm:$0xff]
    %v69 = vld [vmem:[#allocation7 + $0x18] sm:$0xff]
    %v70 = vpack.c.bf16 %v67, %v66
    %v71 = vpack.c.bf16 %v69, %v68
    %vm72 = vcmask 261120
    %v74 = vsel %vm72, %v65, 0
    %76 = vmatpush.bf16.msra.mxu0 0
    %77 = vmatpush.bf16.msra.mxu0 0
    %78 = vmatpush.bf16.msra.mxu0 0
    %79 = vmatpush.bf16.msra.mxu0 0
    %80 = vmatpush.bf16.msra.mxu0 0
    %81 = vmatpush.bf16.msra.mxu0 0
    %82 = vmatpush.bf16.msra.mxu0 %v71
    %83 = vmatpush.bf16.msra.mxu0 %v70
    %84 = vmatmul.bf16.gmra.mxu0 %v74
    %v85 = vpop.f32.mrf.mxu0
    %v86 = vadd.f32 0.0, %v85
    %v87 = vpop.f32.mrf.mxu0
    %v88 = vadd.f32 0.0, %v87
    %89 = vdwg.mxu0
    %v90 = vpack.c.bf16 %v88, %v86
    %v91 = vld [vmem:[#allocation2] sm:$0xff]
    %v92 = vld [vmem:[#allocation2 + $0x8] sm:$0xff]
    %v93 = vpack.c.bf16 %v92, %v91
    %vm94 = vcmask 130048
    %v96 = vsel %vm94, %v93, 0
    %98 = vmatpush.bf16.msra.mxu0 0
    %99 = vmatpush.bf16.msra.mxu0 0
    %100 = vmatpush.bf16.msra.mxu0 0
    %101 = vmatpush.bf16.msra.mxu0 0
    %102 = vmatpush.bf16.msra.mxu0 0
    %103 = vmatpush.bf16.msra.mxu0 0
    %104 = vmatpush.bf16.msra.mxu0 0
    %105 = vmatpush.bf16.msra.mxu0 %v90
    %106 = vmatmul.bf16.gmra.mxu0 %v96
    %v107 = vpop.f32.mrf.mxu0
    %v108 = vadd.f32 0.0, %v107
    %v109 = vpop.f32.mrf.mxu0
    %v110 = vadd.f32 0.0, %v109
    %111 = vdwg.mxu0
    %v112 = vmax.f32 %v108, 0.0
    %v113 = vmax.f32 %v110, 0.0
    %114 = vst.msk [vmem:[#allocation8] sm:$0xff] %vm72, %v112
    %115 = vst.msk [vmem:[#allocation8 + $0x8] sm:$0xff] %vm72, %v113
    // Predicated region
    $region26: #{egcl_forward.1} parent=1 // pred_check
      _
    $region27: #{egcl_forward.1} parent=1 // pred_check_branch
      %117 = sbr.rel (0) target = $region29
    $region28: #{egcl_forward.1} parent=1 // pred_region
      %119 = vsyncadd [#allocation4], 0
      %s120 = sshll.u32 [#allocation8], 4
      %s121 = int_to_ptr.vmem [resolvable:$true] %s120
      %s122 = sshll.u32 %s3, 4
      %s123 = int_to_ptr.hbm [resolvable:$true] %s122
      %128 = dma.vmem_to_hbm [thread:$0]  %s121, 256, %s123, [#allocation4], 128, 128, 8
    $region29: #{egcl_forward.1} parent=1 // pred_fallthru
      _
    // Predicated region
    $region30: #{egcl_forward.1} parent=1 // pred_check
      _
    $region31: #{egcl_forward.1} parent=1 // pred_check_branch
      %130 = sbr.rel (0) target = $region33
    $region32: #{egcl_forward.1} parent=1 // pred_region
      %132 = dma.done [#allocation4], 256
    $region33: #{egcl_forward.1} parent=1 // pred_fallthru
      _
    %133 = vsyncpa [#allocation3], 1
    %134 = vsyncpa [#allocation6], 1
    %135 = vsyncpa [#allocation4], 1

</llo_original>
